<compile_context>
chip_gen: v7x
topology: tpu7x:2x2x1
jax: 0.10.0
libtpu: 0.0.40
codegen_flags: <defaults>
</compile_context>

<pallas_src>
import functools

import jax
import jax.numpy as jnp
from jax.experimental import pallas as pl
from jax.experimental.pallas import tpu as pltpu

EPS = 1e-6


def _round_up(n, m):
    return ((n + m - 1) // m) * m


def _cdiv(a, b):
    return (a + b - 1) // b


def _sublane_packing(dtype):
    # Rows per packed sublane group: f32 -> 8, bf16 -> 16, int8/fp8 -> 32.
    return max(8, 32 // jnp.dtype(dtype).itemsize)


def _default_vmem_budgets():
    """Return (tile_budget_bytes, vmem_limit_bytes), generation aware."""
    vmem_cap = None
    try:
        info = pltpu.get_tpu_info()
        vmem_cap = getattr(info, "vmem_capacity_bytes", None)
    except Exception:  # not on a TPU / interpret mode -> assume smallest chip
        vmem_cap = None
    if vmem_cap is None:
        vmem_cap = 64 * 1024 * 1024
    if vmem_cap >= 96 * 1024 * 1024:
        # v5e / v6e: 128 MiB physical VMEM -> generous scoped limit + tiles.
        return 40 * 1024 * 1024, 64 * 1024 * 1024
    # v7x: 64 MiB physical per TensorCore -> stay near the 32 MiB default.
    return 18 * 1024 * 1024, 32 * 1024 * 1024


def _pick_row_tile(rows, lanes, itemsize, packing, max_row_tile, tile_budget_bytes):
    """Largest row tile whose double-buffered in/out tiles PLUS the in-kernel
    f32 working set (x upcast, centered x, y: ~3 f32 rows) fit the budget."""
    if rows <= packing:
        return rows  # single full-array block (block == array dims is legal)
    bytes_per_row = (4 * itemsize + 3 * 4) * lanes
    by_vmem = (tile_budget_bytes // max(bytes_per_row, 1)) // packing * packing
    tile = max(packing, (int(max_row_tile) // packing) * packing)
    tile = min(tile, max(packing, by_vmem))
    tile = min(tile, _round_up(rows, packing))
    # Keep >= 2 grid steps so dimension_semantics=("parallel",) actually
    # shards rows across the 2 TensorCores on v7x (one extra ~0.35us step on
    # single-TC v5e/v6e — negligible for an HBM-bound kernel).
    tile = min(tile, _round_up(_cdiv(rows, 2), packing))
    return max(tile, packing)


def _layernorm_kernel(x_ref, alpha_ref, bias_ref, o_ref, *, features):
    """Plain path: one logical row per physical row (lane width == features)."""
    x = x_ref[...].astype(jnp.float32)
    # Two-pass mean / variance (no E[x^2]-E[x]^2 cancellation).
    mean = jnp.sum(x, axis=-1, keepdims=True) * jnp.float32(1.0 / features)
    d = x - mean
    # torch.std(dim=-1) default is UNBIASED: divide by (N - 1).
    var = jnp.sum(d * d, axis=-1, keepdims=True) * jnp.float32(1.0 / (features - 1))
    inv = jnp.float32(1.0) / (jnp.sqrt(var) + jnp.float32(EPS))  # (TR, 1)
    o_ref[...] = (d * (alpha_ref[...] * inv) + bias_ref[...]).astype(o_ref.dtype)


def _layernorm_packed_kernel(x_ref, alpha_ref, bias_ref, grp_ref, o_ref, *, features):
    """Lane-packed path (features < 128): g = 128 // features logical rows per
    128-lane physical row.  Per-group reductions are done with a (128, 128)
    0/1 group-sum matrix on the otherwise-idle MXU, so the whole kernel stays
    lane-dense 2-D and every HBM store is an unmasked full vreg."""
    x = x_ref[...].astype(jnp.float32)          # (TR, 128)
    grp = grp_ref[...]                          # (128, 128) block-diagonal 0/1
    s = jnp.dot(x, grp, preferred_element_type=jnp.float32,
                precision=jax.lax.Precision.HIGHEST)        # group sums, bcast
    mean = s * jnp.float32(1.0 / features)
    d = x - mean
    ss = jnp.dot(d * d, grp, preferred_element_type=jnp.float32,
                 precision=jax.lax.Precision.HIGHEST)        # group sumsq
    var = ss * jnp.float32(1.0 / (features - 1))
    inv = jnp.float32(1.0) / (jnp.sqrt(var) + jnp.float32(EPS))
    o_ref[...] = (d * inv * alpha_ref[...] + bias_ref[...]).astype(o_ref.dtype)


def layer_norm_pallas(
    x2d,
    alpha,
    bias,
    *,
    max_row_tile=1024,
    tile_budget_bytes=None,
    vmem_limit_bytes=None,
):
    """LayerNormalization over the last axis of a (R, F) array."""
    R, F = x2d.shape
    if F < 2:
        raise ValueError(
            "LayerNormalization needs features >= 2 (torch std divides by N-1)."
        )

    out_dtype = x2d.dtype
    itemsize = jnp.dtype(out_dtype).itemsize
    packing = _sublane_packing(out_dtype)

    default_budget, default_limit = _default_vmem_budgets()
    if tile_budget_bytes is None:
        tile_budget_bytes = default_budget
    if vmem_limit_bytes is None:
        vmem_limit_bytes = default_limit

    # Lane packing: when F < 128 divides 128 and R is a multiple of g, pack
    # g = 128 // F logical rows into each 128-lane physical row.
    g = 1
    if F < 128 and 128 % F == 0 and R % (128 // F) == 0:
        g = 128 // F
    rows, lanes = R // g, g * F

    x_in = x2d.reshape(rows, lanes)
    alpha32 = alpha.astype(jnp.float32).reshape(1, F)
    bias32 = bias.astype(jnp.float32).reshape(1, F)
    if g > 1:
        alpha32 = jnp.tile(alpha32, (1, g))
        bias32 = jnp.tile(bias32, (1, g))

    tile = _pick_row_tile(rows, lanes, itemsize, packing, max_row_tile,
                          tile_budget_bytes)
    grid = (_cdiv(rows, tile),)

    in_specs = [
        pl.BlockSpec((tile, lanes), lambda i: (i, 0)),
        pl.BlockSpec((1, lanes), lambda i: (0, 0)),
        pl.BlockSpec((1, lanes), lambda i: (0, 0)),
    ]
    args = [x_in, alpha32, bias32]
    if g > 1:
        lane_group = jnp.arange(lanes, dtype=jnp.int32) // F
        grp = (lane_group[:, None] == lane_group[None, :]).astype(jnp.float32)
        in_specs.append(pl.BlockSpec((lanes, lanes), lambda i: (0, 0)))
        args.append(grp)
        kernel = functools.partial(_layernorm_packed_kernel, features=F)
    else:
        kernel = functools.partial(_layernorm_kernel, features=F)

    out = pl.pallas_call(
        kernel,
        out_shape=jax.ShapeDtypeStruct((rows, lanes), out_dtype),
        grid_spec=pl.GridSpec(
            grid=grid,
            in_specs=in_specs,
            out_specs=pl.BlockSpec((tile, lanes), lambda i: (i, 0)),
        ),
        compiler_params=pltpu.CompilerParams(
            dimension_semantics=("parallel",),
            vmem_limit_bytes=vmem_limit_bytes,
        ),
    )(*args)
    return out.reshape(R, F)


def _norm_last_dim(x, alpha, bias):
    F = x.shape[-1]
    return layer_norm_pallas(x.reshape(-1, F), alpha, bias).reshape(x.shape)


def encoder_forward(x, mask, alpha, bias, layers=()):
    """Encoder.forward: apply opaque `layers`, then the Pallas LayerNorm."""
    # TODO(synk): `layers` is an externally supplied nn.ModuleList; their
    # internals are not part of Encoder and are treated as opaque callables.
    for layer in layers:
        x = layer(x, mask)
    return _norm_last_dim(x, alpha, bias)


def decoder_forward(x, encoder_output, src_mask, tgt_mask, alpha, bias, layers=()):
    """Decoder.forward: same structure, same Pallas norm."""
    for layer in layers:
        x = layer(x, encoder_output, src_mask, tgt_mask)
    return _norm_last_dim(x, alpha, bias)


def _reference_layernorm(x, alpha, bias):
    mean = jnp.mean(x, axis=-1, keepdims=True)
    d = x - mean
    var = jnp.sum(d * d, axis=-1, keepdims=True) / (x.shape[-1] - 1)
    std = jnp.sqrt(var)
    return alpha * d / (std + EPS) + bias


if __name__ == "__main__":
    key = jax.random.PRNGKey(0)
    kx, k2, k3, k4, k5 = jax.random.split(key, 5)

    # 1) Encoder-path shapes implied by the module: (batch, seq, features).
    B, S, F = 2, 8, 32
    x = jax.random.normal(kx, (B, S, F), dtype=jnp.float32)
    mask = jnp.ones((B, 1, S, S), dtype=jnp.float32)  # unused with empty layers
    alpha = jnp.ones((F,), dtype=jnp.float32)
    bias = jnp.zeros((F,), dtype=jnp.float32)

    out = jax.block_until_ready(encoder_forward(x, mask, alpha, bias, layers=()))
    ref = _reference_layernorm(x, alpha, bias)
    assert out.shape == (B, S, F)
    assert jnp.allclose(out, ref, atol=1e-5, rtol=1e-5)

    # Non-trivial affine params for the remaining checks.
    alpha_nt = 1.0 + 0.01 * jnp.arange(F, dtype=jnp.float32)
    bias_nt = 0.1 * jnp.arange(F, dtype=jnp.float32)

    # 2) Lane-packed path (F=32 -> g=4) with non-trivial alpha/bias.
    x3 = jax.random.normal(k2, (24, F), dtype=jnp.float32)
    out3 = jax.block_until_ready(layer_norm_pallas(x3, alpha_nt, bias_nt))
    assert jnp.allclose(out3, _reference_layernorm(x3, alpha_nt, bias_nt),
                        atol=1e-5, rtol=1e-5)

    # 3) Fallback (unpacked) path with a ragged last block and multi-step grid.
    x2 = jax.random.normal(k3, (21, F), dtype=jnp.float32)
    out2 = jax.block_until_ready(
        layer_norm_pallas(x2, alpha_nt, bias_nt, max_row_tile=8))
    assert jnp.allclose(out2, _reference_layernorm(x2, alpha_nt, bias_nt),
                        atol=1e-5, rtol=1e-5)

    # 4) Lane-dense F (multiple of 128), ragged rows, >= 2 grid steps.
    F4 = 256
    x4 = jax.random.normal(k4, (40, F4), dtype=jnp.float32)
    a4 = 1.0 + 0.001 * jnp.arange(F4, dtype=jnp.float32)
    b4 = 0.01 * jnp.arange(F4, dtype=jnp.float32)
    out4 = jax.block_until_ready(layer_norm_pallas(x4, a4, b4))
    assert jnp.allclose(out4, _reference_layernorm(x4, a4, b4),
                        atol=1e-5, rtol=1e-5)

    # 5) Decoder path (arbitrary leading dims, e.g. (B, 1, tgt_len, F)).
    x5 = jax.random.normal(k5, (B, 1, 10, F), dtype=jnp.float32)
    out5 = jax.block_until_ready(
        decoder_forward(x5, None, None, None, alpha_nt, bias_nt, layers=()))
    assert jnp.allclose(out5, _reference_layernorm(x5, alpha_nt, bias_nt),
                        atol=1e-5, rtol=1e-5)

    print("KERNEL_OK")
</pallas_src>

<mosaic_0001>
module attributes {stable_mosaic.version = 11 : i64} {
  func.func @_layernorm_packed_kernel(%arg0: i32, %arg1: memref<4x128xf32, #tpu.memory_space<vmem>>, %arg2: memref<1x128xf32, #tpu.memory_space<vmem>>, %arg3: memref<1x128xf32, #tpu.memory_space<vmem>>, %arg4: memref<128x128xf32, #tpu.memory_space<vmem>>, %arg5: memref<4x128xf32, #tpu.memory_space<vmem>>) attributes {dimension_semantics = [#tpu.dimension_semantics<parallel>], iteration_bounds = array<i64: 1>, scalar_prefetch = 0 : i64, scratch_operands = 0 : i64, tpu.core_type = #tpu.core_type<tc>, window_params = [{transform_indices = @transform_0, window_bounds = array<i64: 4, 128>}, {pipeline_mode = #tpu.pipeline_mode<synchronous>, transform_indices = @transform_1, window_bounds = array<i64: 1, 128>}, {pipeline_mode = #tpu.pipeline_mode<synchronous>, transform_indices = @transform_2, window_bounds = array<i64: 1, 128>}, {pipeline_mode = #tpu.pipeline_mode<synchronous>, transform_indices = @transform_3, window_bounds = array<i64: 128, 128>}, {transform_indices = @transform_4, window_bounds = array<i64: 4, 128>}]} {
    %c0 = arith.constant 0 : index
    %c0_0 = arith.constant 0 : index
    %0 = vector.load %arg1[%c0, %c0_0] : memref<4x128xf32, #tpu.memory_space<vmem>>, vector<4x128xf32>
    %c0_1 = arith.constant 0 : index
    %c0_2 = arith.constant 0 : index
    %1 = vector.load %arg4[%c0_1, %c0_2] : memref<128x128xf32, #tpu.memory_space<vmem>>, vector<128x128xf32>
    %cst = arith.constant dense<0.000000e+00> : vector<4x128xf32>
    %2 = tpu.matmul %0, %1, %cst {dimension_numbers = #tpu.dot_dimension_numbers<[1], [0], [0], [1], [0, 0, 1, 1], [], []>, precision = #tpu.contract_precision<fp32>} : vector<4x128xf32>, vector<128x128xf32>, vector<4x128xf32> -> vector<4x128xf32>
    %cst_3 = arith.constant 3.125000e-02 : f32
    %3 = vector.broadcast %cst_3 : f32 to vector<4x128xf32>
    %4 = arith.mulf %2, %3 : vector<4x128xf32>
    %5 = arith.subf %0, %4 : vector<4x128xf32>
    %6 = arith.mulf %5, %5 : vector<4x128xf32>
    %cst_4 = arith.constant dense<0.000000e+00> : vector<4x128xf32>
    %7 = tpu.matmul %6, %1, %cst_4 {dimension_numbers = #tpu.dot_dimension_numbers<[1], [0], [0], [1], [0, 0, 1, 1], [], []>, precision = #tpu.contract_precision<fp32>} : vector<4x128xf32>, vector<128x128xf32>, vector<4x128xf32> -> vector<4x128xf32>
    %cst_5 = arith.constant 0.0322580636 : f32
    %8 = vector.broadcast %cst_5 : f32 to vector<4x128xf32>
    %9 = arith.mulf %7, %8 : vector<4x128xf32>
    %10 = math.sqrt %9 : vector<4x128xf32>
    %cst_6 = arith.constant 9.99999997E-7 : f32
    %11 = vector.broadcast %cst_6 : f32 to vector<4x128xf32>
    %12 = arith.addf %10, %11 : vector<4x128xf32>
    %cst_7 = arith.constant 1.000000e+00 : f32
    %13 = vector.broadcast %cst_7 : f32 to vector<4x128xf32>
    %14 = arith.divf %13, %12 : vector<4x128xf32>
    %15 = arith.mulf %5, %14 : vector<4x128xf32>
    %c0_8 = arith.constant 0 : index
    %c0_9 = arith.constant 0 : index
    %16 = vector.load %arg2[%c0_8, %c0_9] : memref<1x128xf32, #tpu.memory_space<vmem>>, vector<1x128xf32>
    %17 = vector.broadcast %16 : vector<1x128xf32> to vector<4x128xf32>
    %18 = arith.mulf %15, %17 : vector<4x128xf32>
    %c0_10 = arith.constant 0 : index
    %c0_11 = arith.constant 0 : index
    %19 = vector.load %arg3[%c0_10, %c0_11] : memref<1x128xf32, #tpu.memory_space<vmem>>, vector<1x128xf32>
    %20 = vector.broadcast %19 : vector<1x128xf32> to vector<4x128xf32>
    %21 = arith.addf %18, %20 : vector<4x128xf32>
    %c0_12 = arith.constant 0 : index
    %c0_13 = arith.constant 0 : index
    %22 = vector.load %arg5[%c0_12, %c0_13] : memref<4x128xf32, #tpu.memory_space<vmem>>, vector<4x128xf32>
    tpu.vector_store %arg5[%c0_12, %c0_13], %21 {strides = array<i32>} : memref<4x128xf32, #tpu.memory_space<vmem>>, vector<4x128xf32>,
    return
  }
  func.func @transform_0(%arg0: i32) -> (i32, i32) {
    %c0_i32 = arith.constant 0 : i32
    %c0_i32_0 = arith.constant 0 : i32
    return %arg0, %c0_i32 : i32, i32
  }
  func.func @transform_1(%arg0: i32) -> (i32, i32) {
    %c0_i32 = arith.constant 0 : i32
    %c0_i32_0 = arith.constant 0 : i32
    %c0_i32_1 = arith.constant 0 : i32
    return %c0_i32, %c0_i32_0 : i32, i32
  }
  func.func @transform_2(%arg0: i32) -> (i32, i32) {
    %c0_i32 = arith.constant 0 : i32
    %c0_i32_0 = arith.constant 0 : i32
    %c0_i32_1 = arith.constant 0 : i32
    return %c0_i32, %c0_i32_0 : i32, i32
  }
  func.func @transform_3(%arg0: i32) -> (i32, i32) {
    %c0_i32 = arith.constant 0 : i32
    %c0_i32_0 = arith.constant 0 : i32
    %c0_i32_1 = arith.constant 0 : i32
    return %c0_i32, %c0_i32_0 : i32, i32
  }
  func.func @transform_4(%arg0: i32) -> (i32, i32) {
    %c0_i32 = arith.constant 0 : i32
    %c0_i32_0 = arith.constant 0 : i32
    return %arg0, %c0_i32 : i32, i32
  }
}

</mosaic_0001>

<llo_original>
// kernel: tpu_custom_call.1
$region0: #{tpu_custom_call.1}
  #allocation0 [shape = 'u32[]', space=smem, size = 0x4, offset = 0x4, fixed_abs, tag = 'smem constant byte address 0x4 - core index']
  #allocation1 [shape = 'u32[144,128]{1,0:T(1,128)}', space=vmem, size = 0x12000, scoped, tag = 'internal scratch']
  %s0 = inlined_call_operand.hbm [shape: f32[4,128], index: 0, kind: input, shape index: {}]
  %s1 = inlined_call_operand.vmem [shape: f32[1,128], index: 1, kind: input, shape index: {}]
  %s2 = inlined_call_operand.vmem [shape: f32[1,128], index: 2, kind: input, shape index: {}]
  %s3 = inlined_call_operand.hbm [shape: f32[128,128], index: 3, kind: input, shape index: {}]
  %s4 = inlined_call_operand.hbm [shape: f32[4,128], index: 4, kind: output, shape index: {}]
  %s5 = sld [smem:[#allocation0]]
  $region34: #{tpu_custom_call.1} parent=0
    _
  %s7 = ssub.s32 1, %s5
  %s8 = scalar_select 0, %s7, %s5
  $region1: #{tpu_custom_call.1} parent=0
    #allocation2 [shape = 'u8[2048]{0}', space=vmem, size = 0x800, scoped, tag = 'input window, operand 0, single buffered']
    #allocation3 [shape = 's32[1]{0}', space=sflag, size = 0x4, scoped, tag = 'scoped memory for tpu_custom_call.1']
    #allocation4 [shape = 's32[1]{0}', space=sflag, size = 0x4, scoped, tag = 'scoped memory for tpu_custom_call.1']
    #allocation5 [shape = 'u8[65536]{0}', space=vmem, size = 0x10000, scoped, tag = 'input window, operand 3, single buffered']
    #allocation6 [shape = 's32[1]{0}', space=sflag, size = 0x4, scoped, tag = 'scoped memory for tpu_custom_call.1']
    #allocation7 [shape = 'u8[2048]{0}', space=vmem, size = 0x800, scoped, tag = 'output window, operand 0, single buffered']
    %9 = vsyncpa [#allocation3], 0
    %10 = vsyncpa [#allocation6], 0
    %11 = vsyncpa [#allocation4], 0
    // Predicated region
    $region2: #{tpu_custom_call.1} parent=1 // pred_check
      _
    $region3: #{tpu_custom_call.1} parent=1 // pred_check_branch
      %13 = sbr.rel (0) target = $region5
    $region4: #{tpu_custom_call.1} parent=1 // pred_region
      %s15 = ssub.s32 64, 64
      %16 = vsyncadd [#allocation3], %s15
      %s18 = sshll.u32 [#allocation2], 4
      %s19 = int_to_ptr.vmem [resolvable:$true] %s18
      %21 = dma.hbm_to_vmem [thread:$0]  %s0, 64, %s19, [#allocation3]
    $region5: #{tpu_custom_call.1} parent=1 // pred_fallthru
      _
    // Predicated region
    $region6: #{tpu_custom_call.1} parent=1 // pred_check
      _
    $region7: #{tpu_custom_call.1} parent=1 // pred_check_branch
      %23 = sbr.rel (0) target = $region9
    $region8: #{tpu_custom_call.1} parent=1 // pred_region
      _
    $region9: #{tpu_custom_call.1} parent=1 // pred_fallthru
      _
    // Predicated region
    $region10: #{tpu_custom_call.1} parent=1 // pred_check
      _
    $region11: #{tpu_custom_call.1} parent=1 // pred_check_branch
      %25 = sbr.rel (0) target = $region13
    $region12: #{tpu_custom_call.1} parent=1 // pred_region
      _
    $region13: #{tpu_custom_call.1} parent=1 // pred_fallthru
      _
    // Predicated region
    $region14: #{tpu_custom_call.1} parent=1 // pred_check
      _
    $region15: #{tpu_custom_call.1} parent=1 // pred_check_branch
      %27 = sbr.rel (0) target = $region17
    $region16: #{tpu_custom_call.1} parent=1 // pred_region
      %s29 = ssub.s32 2048, 2048
      %30 = vsyncadd [#allocation6], %s29
      %s31 = sshll.u32 [#allocation5], 4
      %s32 = int_to_ptr.vmem [resolvable:$true] %s31
      %37 = dma.hbm_to_vmem [thread:$0]  %s3, 2048, %s32, [#allocation6], 128, 128, 8
    $region17: #{tpu_custom_call.1} parent=1 // pred_fallthru
      _
    // Predicated region
    $region18: #{tpu_custom_call.1} parent=1 // pred_check
      _
    $region19: #{tpu_custom_call.1} parent=1 // pred_check_branch
      %39 = sbr.rel (0) target = $region21
    $region20: #{tpu_custom_call.1} parent=1 // pred_region
      %40 = dma.done [#allocation3], 64
    $region21: #{tpu_custom_call.1} parent=1 // pred_fallthru
      _
    // Predicated region
    $region22: #{tpu_custom_call.1} parent=1 // pred_check
      _
    $region23: #{tpu_custom_call.1} parent=1 // pred_check_branch
      %42 = sbr.rel (0) target = $region25
    $region24: #{tpu_custom_call.1} parent=1 // pred_region
      %43 = dma.done [#allocation6], 2048
    $region25: #{tpu_custom_call.1} parent=1 // pred_fallthru
      _
    %v44 = vld [vmem:[#allocation2] sm:$0xf]
    %v45 = vld [vmem:[#allocation5] sm:$0xff]
    %v46 = vld [vmem:[#allocation5 + $0x8] sm:$0xff]
    %v47 = vld [vmem:[#allocation5 + $0x10] sm:$0xff]
    %v48 = vld [vmem:[#allocation5 + $0x18] sm:$0xff]
    %v49 = vld [vmem:[#allocation5 + $0x20] sm:$0xff]
    %v50 = vld [vmem:[#allocation5 + $0x28] sm:$0xff]
    %v51 = vld [vmem:[#allocation5 + $0x30] sm:$0xff]
    %v52 = vld [vmem:[#allocation5 + $0x38] sm:$0xff]
    %v53 = vld [vmem:[#allocation5 + $0x40] sm:$0xff]
    %v54 = vld [vmem:[#allocation5 + $0x48] sm:$0xff]
    %v55 = vld [vmem:[#allocation5 + $0x50] sm:$0xff]
    %v56 = vld [vmem:[#allocation5 + $0x58] sm:$0xff]
    %v57 = vld [vmem:[#allocation5 + $0x60] sm:$0xff]
    %v58 = vld [vmem:[#allocation5 + $0x68] sm:$0xff]
    %v59 = vld [vmem:[#allocation5 + $0x70] sm:$0xff]
    %v60 = vld [vmem:[#allocation5 + $0x78] sm:$0xff]
    %61 = vmatprep.subr.mxu0 0.0
    %v62 = vand.u32 %v45, 4294901760
    %63 = vmatpush1.msra.mxu0 %v62
    %64 = vmatprep.subr.mxu0 0.0
    %v65 = vand.u32 %v46, 4294901760
    %66 = vmatpush1.msra.mxu0 %v65
    %67 = vmatprep.subr.mxu0 0.0
    %v68 = vand.u32 %v47, 4294901760
    %69 = vmatpush1.msra.mxu0 %v68
    %70 = vmatprep.subr.mxu0 0.0
    %v71 = vand.u32 %v48, 4294901760
    %72 = vmatpush1.msra.mxu0 %v71
    %73 = vmatprep.subr.mxu0 0.0
    %v74 = vand.u32 %v49, 4294901760
    %75 = vmatpush1.msra.mxu0 %v74
    %76 = vmatprep.subr.mxu0 0.0
    %v77 = vand.u32 %v50, 4294901760
    %78 = vmatpush1.msra.mxu0 %v77
    %79 = vmatprep.subr.mxu0 0.0
    %v80 = vand.u32 %v51, 4294901760
    %81 = vmatpush1.msra.mxu0 %v80
    %82 = vmatprep.subr.mxu0 0.0
    %v83 = vand.u32 %v52, 4294901760
    %84 = vmatpush1.msra.mxu0 %v83
    %85 = vmatprep.subr.mxu0 0.0
    %v86 = vand.u32 %v53, 4294901760
    %87 = vmatpush1.msra.mxu0 %v86
    %88 = vmatprep.subr.mxu0 0.0
    %v89 = vand.u32 %v54, 4294901760
    %90 = vmatpush1.msra.mxu0 %v89
    %91 = vmatprep.subr.mxu0 0.0
    %v92 = vand.u32 %v55, 4294901760
    %93 = vmatpush1.msra.mxu0 %v92
    %94 = vmatprep.subr.mxu0 0.0
    %v95 = vand.u32 %v56, 4294901760
    %96 = vmatpush1.msra.mxu0 %v95
    %97 = vmatprep.subr.mxu0 0.0
    %v98 = vand.u32 %v57, 4294901760
    %99 = vmatpush1.msra.mxu0 %v98
    %100 = vmatprep.subr.mxu0 0.0
    %v101 = vand.u32 %v58, 4294901760
    %102 = vmatpush1.msra.mxu0 %v101
    %103 = vmatprep.subr.mxu0 0.0
    %v104 = vand.u32 %v59, 4294901760
    %105 = vmatpush1.msra.mxu0 %v104
    %106 = vmatprep.subr.mxu0 0.0
    %v107 = vand.u32 %v60, 4294901760
    %108 = vmatpush1.msra.mxu0 %v107
    %109 = vmatprep.subr.mxu0 0.0
    %110 = vmatpush1.msra.mxu0 0.0
    %111 = vmatprep.subr.mxu0 0.0
    %112 = vmatpush1.msra.mxu0 0.0
    %113 = vmatprep.subr.mxu0 0.0
    %114 = vmatpush1.msra.mxu0 0.0
    %115 = vmatprep.subr.mxu0 0.0
    %116 = vmatpush1.msra.mxu0 0.0
    %117 = vmatprep.subr.mxu0 0.0
    %118 = vmatpush1.msra.mxu0 0.0
    %119 = vmatprep.subr.mxu0 0.0
    %120 = vmatpush1.msra.mxu0 0.0
    %121 = vmatprep.subr.mxu0 0.0
    %122 = vmatpush1.msra.mxu0 0.0
    %123 = vmatprep.subr.mxu0 0.0
    %124 = vmatpush1.msra.mxu0 0.0
    %125 = vmatprep.subr.mxu0 0.0
    %126 = vmatpush1.msra.mxu0 0.0
    %127 = vmatprep.subr.mxu0 0.0
    %128 = vmatpush1.msra.mxu0 0.0
    %129 = vmatprep.subr.mxu0 0.0
    %130 = vmatpush1.msra.mxu0 0.0
    %131 = vmatprep.subr.mxu0 0.0
    %132 = vmatpush1.msra.mxu0 0.0
    %133 = vmatprep.subr.mxu0 0.0
    %134 = vmatpush1.msra.mxu0 0.0
    %135 = vmatprep.subr.mxu0 0.0
    %136 = vmatpush1.msra.mxu0 0.0
    %137 = vmatprep.subr.mxu0 0.0
    %138 = vmatpush1.msra.mxu0 0.0
    %139 = vmatprep.subr.mxu0 0.0
    %140 = vmatpush1.msra.mxu0 0.0
    %141 = vmatprep.mubr.f32.mxu0 0.0
    %v142 = vand.u32 %v44, 4294901760
    %v143 = vsub.f32 %v44, %v142
    %v144 = vand.u32 %v143, 4294901760
    %v145 = vsub.f32 %v143, %v144
    %v146 = vand.u32 %v145, 4294901760
    %147 = vmatmul.mubr.f32.gmra.mrb[0].mxu0 %v146
    %v148 = vpop.f32.mrb[0].mxu0
    %v149 = vadd.f32 0.0, %v148
    %v150 = vpop.f32.mrb[0].mxu0
    %151 = vdwg.mxu0
    %152 = vmatprep.subr.mxu0 0.0
    %v153 = vand.u32 %v45, 4294901760
    %v154 = vsub.f32 %v45, %v153
    %v155 = vand.u32 %v154, 4294901760
    %v156 = vsub.f32 %v154, %v155
    %v157 = vand.u32 %v156, 4294901760
    %158 = vmatpush1.msra.mxu0 %v157
    %159 = vmatprep.subr.mxu0 0.0
    %v160 = vand.u32 %v46, 4294901760
    %v161 = vsub.f32 %v46, %v160
    %v162 = vand.u32 %v161, 4294901760
    %v163 = vsub.f32 %v161, %v162
    %v164 = vand.u32 %v163, 4294901760
    %165 = vmatpush1.msra.mxu0 %v164
    %166 = vmatprep.subr.mxu0 0.0
    %v167 = vand.u32 %v47, 4294901760
    %v168 = vsub.f32 %v47, %v167
    %v169 = vand.u32 %v168, 4294901760
    %v170 = vsub.f32 %v168, %v169
    %v171 = vand.u32 %v170, 4294901760
    %172 = vmatpush1.msra.mxu0 %v171
    %173 = vmatprep.subr.mxu0 0.0
    %v174 = vand.u32 %v48, 4294901760
    %v175 = vsub.f32 %v48, %v174
    %v176 = vand.u32 %v175, 4294901760
    %v177 = vsub.f32 %v175, %v176
    %v178 = vand.u32 %v177, 4294901760
    %179 = vmatpush1.msra.mxu0 %v178
    %180 = vmatprep.subr.mxu0 0.0
    %v181 = vand.u32 %v49, 4294901760
    %v182 = vsub.f32 %v49, %v181
    %v183 = vand.u32 %v182, 4294901760
    %v184 = vsub.f32 %v182, %v183
    %v185 = vand.u32 %v184, 4294901760
    %186 = vmatpush1.msra.mxu0 %v185
    %187 = vmatprep.subr.mxu0 0.0
    %v188 = vand.u32 %v50, 4294901760
    %v189 = vsub.f32 %v50, %v188
    %v190 = vand.u32 %v189, 4294901760
    %v191 = vsub.f32 %v189, %v190
    %v192 = vand.u32 %v191, 4294901760
    %193 = vmatpush1.msra.mxu0 %v192
    %194 = vmatprep.subr.mxu0 0.0
    %v195 = vand.u32 %v51, 4294901760
    %v196 = vsub.f32 %v51, %v195
    %v197 = vand.u32 %v196, 4294901760
    %v198 = vsub.f32 %v196, %v197
    %v199 = vand.u32 %v198, 4294901760
    %200 = vmatpush1.msra.mxu0 %v199
    %201 = vmatprep.subr.mxu0 0.0
    %v202 = vand.u32 %v52, 4294901760
    %v203 = vsub.f32 %v52, %v202
    %v204 = vand.u32 %v203, 4294901760
    %v205 = vsub.f32 %v203, %v204
    %v206 = vand.u32 %v205, 4294901760
    %207 = vmatpush1.msra.mxu0 %v206
    %208 = vmatprep.subr.mxu0 0.0
    %v209 = vand.u32 %v53, 4294901760
    %v210 = vsub.f32 %v53, %v209
    %v211 = vand.u32 %v210, 4294901760
    %v212 = vsub.f32 %v210, %v211
    %v213 = vand.u32 %v212, 4294901760
    %214 = vmatpush1.msra.mxu0 %v213
    %215 = vmatprep.subr.mxu0 0.0
    %v216 = vand.u32 %v54, 4294901760
    %v217 = vsub.f32 %v54, %v216
    %v218 = vand.u32 %v217, 4294901760
    %v219 = vsub.f32 %v217, %v218
    %v220 = vand.u32 %v219, 4294901760
    %221 = vmatpush1.msra.mxu0 %v220
    %222 = vmatprep.subr.mxu0 0.0
    %v223 = vand.u32 %v55, 4294901760
    %v224 = vsub.f32 %v55, %v223
    %v225 = vand.u32 %v224, 4294901760
    %v226 = vsub.f32 %v224, %v225
    %v227 = vand.u32 %v226, 4294901760
    %228 = vmatpush1.msra.mxu0 %v227
    %229 = vmatprep.subr.mxu0 0.0
    %v230 = vand.u32 %v56, 4294901760
    %v231 = vsub.f32 %v56, %v230
    %v232 = vand.u32 %v231, 4294901760
    %v233 = vsub.f32 %v231, %v232
    %v234 = vand.u32 %v233, 4294901760
    %235 = vmatpush1.msra.mxu0 %v234
    %236 = vmatprep.subr.mxu0 0.0
    %v237 = vand.u32 %v57, 4294901760
    %v238 = vsub.f32 %v57, %v237
    %v239 = vand.u32 %v238, 4294901760
    %v240 = vsub.f32 %v238, %v239
    %v241 = vand.u32 %v240, 4294901760
    %242 = vmatpush1.msra.mxu0 %v241
    %243 = vmatprep.subr.mxu0 0.0
    %v244 = vand.u32 %v58, 4294901760
    %v245 = vsub.f32 %v58, %v244
    %v246 = vand.u32 %v245, 4294901760
    %v247 = vsub.f32 %v245, %v246
    %v248 = vand.u32 %v247, 4294901760
    %249 = vmatpush1.msra.mxu0 %v248
    %250 = vmatprep.subr.mxu0 0.0
    %v251 = vand.u32 %v59, 4294901760
    %v252 = vsub.f32 %v59, %v251
    %v253 = vand.u32 %v252, 4294901760
    %v254 = vsub.f32 %v252, %v253
    %v255 = vand.u32 %v254, 4294901760
    %256 = vmatpush1.msra.mxu0 %v255
    %257 = vmatprep.subr.mxu0 0.0
    %v258 = vand.u32 %v60, 4294901760
    %v259 = vsub.f32 %v60, %v258
    %v260 = vand.u32 %v259, 4294901760
    %v261 = vsub.f32 %v259, %v260
    %v262 = vand.u32 %v261, 4294901760
    %263 = vmatpush1.msra.mxu0 %v262
    %264 = vmatprep.subr.mxu0 0.0
    %265 = vmatpush1.msra.mxu0 0.0
    %266 = vmatprep.subr.mxu0 0.0
    %267 = vmatpush1.msra.mxu0 0.0
    %268 = vmatprep.subr.mxu0 0.0
    %269 = vmatpush1.msra.mxu0 0.0
    %270 = vmatprep.subr.mxu0 0.0
    %271 = vmatpush1.msra.mxu0 0.0
    %272 = vmatprep.subr.mxu0 0.0
    %273 = vmatpush1.msra.mxu0 0.0
    %274 = vmatprep.subr.mxu0 0.0
    %275 = vmatpush1.msra.mxu0 0.0
    %276 = vmatprep.subr.mxu0 0.0
    %277 = vmatpush1.msra.mxu0 0.0
    %278 = vmatprep.subr.mxu0 0.0
    %279 = vmatpush1.msra.mxu0 0.0
    %280 = vmatprep.subr.mxu0 0.0
    %281 = vmatpush1.msra.mxu0 0.0
    %282 = vmatprep.subr.mxu0 0.0
    %283 = vmatpush1.msra.mxu0 0.0
    %284 = vmatprep.subr.mxu0 0.0
    %285 = vmatpush1.msra.mxu0 0.0
    %286 = vmatprep.subr.mxu0 0.0
    %287 = vmatpush1.msra.mxu0 0.0
    %288 = vmatprep.subr.mxu0 0.0
    %289 = vmatpush1.msra.mxu0 0.0
    %290 = vmatprep.subr.mxu0 0.0
    %291 = vmatpush1.msra.mxu0 0.0
    %292 = vmatprep.subr.mxu0 0.0
    %293 = vmatpush1.msra.mxu0 0.0
    %294 = vmatprep.subr.mxu0 0.0
    %295 = vmatpush1.msra.mxu0 0.0
    %296 = vmatprep.mubr.f32.mxu0 0.0
    %v297 = vand.u32 %v44, 4294901760
    %298 = vmatmul.mubr.f32.gmra.mrb[0].mxu0 %v297
    %v299 = vpop.f32.mrb[0].mxu0
    %v300 = vadd.f32 %v149, %v299
    %v301 = vpop.f32.mrb[0].mxu0
    %302 = vdwg.mxu0
    %303 = vmatprep.subr.mxu0 0.0
    %v304 = vand.u32 %v45, 4294901760
    %v305 = vsub.f32 %v45, %v304
    %306 = vmatpush1.msra.mxu0 %v305
    %307 = vmatprep.subr.mxu0 0.0
    %v308 = vand.u32 %v46, 4294901760
    %v309 = vsub.f32 %v46, %v308
    %310 = vmatpush1.msra.mxu0 %v309
    %311 = vmatprep.subr.mxu0 0.0
    %v312 = vand.u32 %v47, 4294901760
    %v313 = vsub.f32 %v47, %v312
    %314 = vmatpush1.msra.mxu0 %v313
    %315 = vmatprep.subr.mxu0 0.0
    %v316 = vand.u32 %v48, 4294901760
    %v317 = vsub.f32 %v48, %v316
    %318 = vmatpush1.msra.mxu0 %v317
    %319 = vmatprep.subr.mxu0 0.0
    %v320 = vand.u32 %v49, 4294901760
    %v321 = vsub.f32 %v49, %v320
    %322 = vmatpush1.msra.mxu0 %v321
    %323 = vmatprep.subr.mxu0 0.0
    %v324 = vand.u32 %v50, 4294901760
    %v325 = vsub.f32 %v50, %v324
    %326 = vmatpush1.msra.mxu0 %v325
    %327 = vmatprep.subr.mxu0 0.0
    %v328 = vand.u32 %v51, 4294901760
    %v329 = vsub.f32 %v51, %v328
    %330 = vmatpush1.msra.mxu0 %v329
    %331 = vmatprep.subr.mxu0 0.0
    %v332 = vand.u32 %v52, 4294901760
    %v333 = vsub.f32 %v52, %v332
    %334 = vmatpush1.msra.mxu0 %v333
    %335 = vmatprep.subr.mxu0 0.0
    %v336 = vand.u32 %v53, 4294901760
    %v337 = vsub.f32 %v53, %v336
    %338 = vmatpush1.msra.mxu0 %v337
    %339 = vmatprep.subr.mxu0 0.0
    %v340 = vand.u32 %v54, 4294901760
    %v341 = vsub.f32 %v54, %v340
    %342 = vmatpush1.msra.mxu0 %v341
    %343 = vmatprep.subr.mxu0 0.0
    %v344 = vand.u32 %v55, 4294901760
    %v345 = vsub.f32 %v55, %v344
    %346 = vmatpush1.msra.mxu0 %v345
    %347 = vmatprep.subr.mxu0 0.0
    %v348 = vand.u32 %v56, 4294901760
    %v349 = vsub.f32 %v56, %v348
    %350 = vmatpush1.msra.mxu0 %v349
    %351 = vmatprep.subr.mxu0 0.0
    %v352 = vand.u32 %v57, 4294901760
    %v353 = vsub.f32 %v57, %v352
    %354 = vmatpush1.msra.mxu0 %v353
    %355 = vmatprep.subr.mxu0 0.0
    %v356 = vand.u32 %v58, 4294901760
    %v357 = vsub.f32 %v58, %v356
    %358 = vmatpush1.msra.mxu0 %v357
    %359 = vmatprep.subr.mxu0 0.0
    %v360 = vand.u32 %v59, 4294901760
    %v361 = vsub.f32 %v59, %v360
    %362 = vmatpush1.msra.mxu0 %v361
    %363 = vmatprep.subr.mxu0 0.0
    %v364 = vand.u32 %v60, 4294901760
    %v365 = vsub.f32 %v60, %v364
    %366 = vmatpush1.msra.mxu0 %v365
    %367 = vmatprep.subr.mxu0 0.0
    %368 = vmatpush1.msra.mxu0 0.0
    %369 = vmatprep.subr.mxu0 0.0
    %370 = vmatpush1.msra.mxu0 0.0
    %371 = vmatprep.subr.mxu0 0.0
    %372 = vmatpush1.msra.mxu0 0.0
    %373 = vmatprep.subr.mxu0 0.0
    %374 = vmatpush1.msra.mxu0 0.0
    %375 = vmatprep.subr.mxu0 0.0
    %376 = vmatpush1.msra.mxu0 0.0
    %377 = vmatprep.subr.mxu0 0.0
    %378 = vmatpush1.msra.mxu0 0.0
    %379 = vmatprep.subr.mxu0 0.0
    %380 = vmatpush1.msra.mxu0 0.0
    %381 = vmatprep.subr.mxu0 0.0
    %382 = vmatpush1.msra.mxu0 0.0
    %383 = vmatprep.subr.mxu0 0.0
    %384 = vmatpush1.msra.mxu0 0.0
    %385 = vmatprep.subr.mxu0 0.0
    %386 = vmatpush1.msra.mxu0 0.0
    %387 = vmatprep.subr.mxu0 0.0
    %388 = vmatpush1.msra.mxu0 0.0
    %389 = vmatprep.subr.mxu0 0.0
    %390 = vmatpush1.msra.mxu0 0.0
    %391 = vmatprep.subr.mxu0 0.0
    %392 = vmatpush1.msra.mxu0 0.0
    %393 = vmatprep.subr.mxu0 0.0
    %394 = vmatpush1.msra.mxu0 0.0
    %395 = vmatprep.subr.mxu0 0.0
    %396 = vmatpush1.msra.mxu0 0.0
    %397 = vmatprep.subr.mxu0 0.0
    %398 = vmatpush1.msra.mxu0 0.0
    %399 = vmatprep.mubr.f32.mxu0 0.0
    %v400 = vand.u32 %v44, 4294901760
    %v401 = vsub.f32 %v44, %v400
    %402 = vmatmul.mubr.f32.gmra.mrb[0].mxu0 %v401
    %v403 = vpop.f32.mrb[0].mxu0
    %v404 = vadd.f32 %v300, %v403
    %v405 = vpop.f32.mrb[0].mxu0
    %406 = vdwg.mxu0
    %407 = vmatprep.subr.mxu0 0.0
    %v408 = vand.u32 %v45, 4294901760
    %409 = vmatpush1.msra.mxu0 %v408
    %410 = vmatprep.subr.mxu0 0.0
    %v411 = vand.u32 %v46, 4294901760
    %412 = vmatpush1.msra.mxu0 %v411
    %413 = vmatprep.subr.mxu0 0.0
    %v414 = vand.u32 %v47, 4294901760
    %415 = vmatpush1.msra.mxu0 %v414
    %416 = vmatprep.subr.mxu0 0.0
    %v417 = vand.u32 %v48, 4294901760
    %418 = vmatpush1.msra.mxu0 %v417
    %419 = vmatprep.subr.mxu0 0.0
    %v420 = vand.u32 %v49, 4294901760
    %421 = vmatpush1.msra.mxu0 %v420
    %422 = vmatprep.subr.mxu0 0.0
    %v423 = vand.u32 %v50, 4294901760
    %424 = vmatpush1.msra.mxu0 %v423
    %425 = vmatprep.subr.mxu0 0.0
    %v426 = vand.u32 %v51, 4294901760
    %427 = vmatpush1.msra.mxu0 %v426
    %428 = vmatprep.subr.mxu0 0.0
    %v429 = vand.u32 %v52, 4294901760
    %430 = vmatpush1.msra.mxu0 %v429
    %431 = vmatprep.subr.mxu0 0.0
    %v432 = vand.u32 %v53, 4294901760
    %433 = vmatpush1.msra.mxu0 %v432
    %434 = vmatprep.subr.mxu0 0.0
    %v435 = vand.u32 %v54, 4294901760
    %436 = vmatpush1.msra.mxu0 %v435
    %437 = vmatprep.subr.mxu0 0.0
    %v438 = vand.u32 %v55, 4294901760
    %439 = vmatpush1.msra.mxu0 %v438
    %440 = vmatprep.subr.mxu0 0.0
    %v441 = vand.u32 %v56, 4294901760
    %442 = vmatpush1.msra.mxu0 %v441
    %443 = vmatprep.subr.mxu0 0.0
    %v444 = vand.u32 %v57, 4294901760
    %445 = vmatpush1.msra.mxu0 %v444
    %446 = vmatprep.subr.mxu0 0.0
    %v447 = vand.u32 %v58, 4294901760
    %448 = vmatpush1.msra.mxu0 %v447
    %449 = vmatprep.subr.mxu0 0.0
    %v450 = vand.u32 %v59, 4294901760
    %451 = vmatpush1.msra.mxu0 %v450
    %452 = vmatprep.subr.mxu0 0.0
    %v453 = vand.u32 %v60, 4294901760
    %454 = vmatpush1.msra.mxu0 %v453
    %455 = vmatprep.subr.mxu0 0.0
    %456 = vmatpush1.msra.mxu0 0.0
    %457 = vmatprep.subr.mxu0 0.0
    %458 = vmatpush1.msra.mxu0 0.0
    %459 = vmatprep.subr.mxu0 0.0
    %460 = vmatpush1.msra.mxu0 0.0
    %461 = vmatprep.subr.mxu0 0.0
    %462 = vmatpush1.msra.mxu0 0.0
    %463 = vmatprep.subr.mxu0 0.0
    %464 = vmatpush1.msra.mxu0 0.0
    %465 = vmatprep.subr.mxu0 0.0
    %466 = vmatpush1.msra.mxu0 0.0
    %467 = vmatprep.subr.mxu0 0.0
    %468 = vmatpush1.msra.mxu0 0.0
    %469 = vmatprep.subr.mxu0 0.0
    %470 = vmatpush1.msra.mxu0 0.0
    %471 = vmatprep.subr.mxu0 0.0
    %472 = vmatpush1.msra.mxu0 0.0
    %473 = vmatprep.subr.mxu0 0.0
    %474 = vmatpush1.msra.mxu0 0.0
    %475 = vmatprep.subr.mxu0 0.0
    %476 = vmatpush1.msra.mxu0 0.0
    %477 = vmatprep.subr.mxu0 0.0
    %478 = vmatpush1.msra.mxu0 0.0
    %479 = vmatprep.subr.mxu0 0.0
    %480 = vmatpush1.msra.mxu0 0.0
    %481 = vmatprep.subr.mxu0 0.0
    %482 = vmatpush1.msra.mxu0 0.0
    %483 = vmatprep.subr.mxu0 0.0
    %484 = vmatpush1.msra.mxu0 0.0
    %485 = vmatprep.subr.mxu0 0.0
    %486 = vmatpush1.msra.mxu0 0.0
    %487 = vmatprep.mubr.f32.mxu0 0.0
    %v488 = vand.u32 %v44, 4294901760
    %v489 = vsub.f32 %v44, %v488
    %v490 = vand.u32 %v489, 4294901760
    %491 = vmatmul.mubr.f32.gmra.mrb[0].mxu0 %v490
    %v492 = vpop.f32.mrb[0].mxu0
    %v493 = vadd.f32 %v404, %v492
    %v494 = vpop.f32.mrb[0].mxu0
    %495 = vdwg.mxu0
    %496 = vmatprep.subr.mxu0 0.0
    %v497 = vand.u32 %v45, 4294901760
    %v498 = vsub.f32 %v45, %v497
    %v499 = vand.u32 %v498, 4294901760
    %500 = vmatpush1.msra.mxu0 %v499
    %501 = vmatprep.subr.mxu0 0.0
    %v502 = vand.u32 %v46, 4294901760
    %v503 = vsub.f32 %v46, %v502
    %v504 = vand.u32 %v503, 4294901760
    %505 = vmatpush1.msra.mxu0 %v504
    %506 = vmatprep.subr.mxu0 0.0
    %v507 = vand.u32 %v47, 4294901760
    %v508 = vsub.f32 %v47, %v507
    %v509 = vand.u32 %v508, 4294901760
    %510 = vmatpush1.msra.mxu0 %v509
    %511 = vmatprep.subr.mxu0 0.0
    %v512 = vand.u32 %v48, 4294901760
    %v513 = vsub.f32 %v48, %v512
    %v514 = vand.u32 %v513, 4294901760
    %515 = vmatpush1.msra.mxu0 %v514
    %516 = vmatprep.subr.mxu0 0.0
    %v517 = vand.u32 %v49, 4294901760
    %v518 = vsub.f32 %v49, %v517
    %v519 = vand.u32 %v518, 4294901760
    %520 = vmatpush1.msra.mxu0 %v519
    %521 = vmatprep.subr.mxu0 0.0
    %v522 = vand.u32 %v50, 4294901760
    %v523 = vsub.f32 %v50, %v522
    %v524 = vand.u32 %v523, 4294901760
    %525 = vmatpush1.msra.mxu0 %v524
    %526 = vmatprep.subr.mxu0 0.0
    %v527 = vand.u32 %v51, 4294901760
    %v528 = vsub.f32 %v51, %v527
    %v529 = vand.u32 %v528, 4294901760
    %530 = vmatpush1.msra.mxu0 %v529
    %531 = vmatprep.subr.mxu0 0.0
    %v532 = vand.u32 %v52, 4294901760
    %v533 = vsub.f32 %v52, %v532
    %v534 = vand.u32 %v533, 4294901760
    %535 = vmatpush1.msra.mxu0 %v534
    %536 = vmatprep.subr.mxu0 0.0
    %v537 = vand.u32 %v53, 4294901760
    %v538 = vsub.f32 %v53, %v537
    %v539 = vand.u32 %v538, 4294901760
    %540 = vmatpush1.msra.mxu0 %v539
    %541 = vmatprep.subr.mxu0 0.0
    %v542 = vand.u32 %v54, 4294901760
    %v543 = vsub.f32 %v54, %v542
    %v544 = vand.u32 %v543, 4294901760
    %545 = vmatpush1.msra.mxu0 %v544
    %546 = vmatprep.subr.mxu0 0.0
    %v547 = vand.u32 %v55, 4294901760
    %v548 = vsub.f32 %v55, %v547
    %v549 = vand.u32 %v548, 4294901760
    %550 = vmatpush1.msra.mxu0 %v549
    %551 = vmatprep.subr.mxu0 0.0
    %v552 = vand.u32 %v56, 4294901760
    %v553 = vsub.f32 %v56, %v552
    %v554 = vand.u32 %v553, 4294901760
    %555 = vmatpush1.msra.mxu0 %v554
    %556 = vmatprep.subr.mxu0 0.0
    %v557 = vand.u32 %v57, 4294901760
    %v558 = vsub.f32 %v57, %v557
    %v559 = vand.u32 %v558, 4294901760
    %560 = vmatpush1.msra.mxu0 %v559
    %561 = vmatprep.subr.mxu0 0.0
    %v562 = vand.u32 %v58, 4294901760
    %v563 = vsub.f32 %v58, %v562
    %v564 = vand.u32 %v563, 4294901760
    %565 = vmatpush1.msra.mxu0 %v564
    %566 = vmatprep.subr.mxu0 0.0
    %v567 = vand.u32 %v59, 4294901760
    %v568 = vsub.f32 %v59, %v567
    %v569 = vand.u32 %v568, 4294901760
    %570 = vmatpush1.msra.mxu0 %v569
    %571 = vmatprep.subr.mxu0 0.0
    %v572 = vand.u32 %v60, 4294901760
    %v573 = vsub.f32 %v60, %v572
    %v574 = vand.u32 %v573, 4294901760
    %575 = vmatpush1.msra.mxu0 %v574
    %576 = vmatprep.subr.mxu0 0.0
    %577 = vmatpush1.msra.mxu0 0.0
    %578 = vmatprep.subr.mxu0 0.0
    %579 = vmatpush1.msra.mxu0 0.0
    %580 = vmatprep.subr.mxu0 0.0
    %581 = vmatpush1.msra.mxu0 0.0
    %582 = vmatprep.subr.mxu0 0.0
    %583 = vmatpush1.msra.mxu0 0.0
    %584 = vmatprep.subr.mxu0 0.0
    %585 = vmatpush1.msra.mxu0 0.0
    %586 = vmatprep.subr.mxu0 0.0
    %587 = vmatpush1.msra.mxu0 0.0
    %588 = vmatprep.subr.mxu0 0.0
    %589 = vmatpush1.msra.mxu0 0.0
    %590 = vmatprep.subr.mxu0 0.0
    %591 = vmatpush1.msra.mxu0 0.0
    %592 = vmatprep.subr.mxu0 0.0
    %593 = vmatpush1.msra.mxu0 0.0
    %594 = vmatprep.subr.mxu0 0.0
    %595 = vmatpush1.msra.mxu0 0.0
    %596 = vmatprep.subr.mxu0 0.0
    %597 = vmatpush1.msra.mxu0 0.0
    %598 = vmatprep.subr.mxu0 0.0
    %599 = vmatpush1.msra.mxu0 0.0
    %600 = vmatprep.subr.mxu0 0.0
    %601 = vmatpush1.msra.mxu0 0.0
    %602 = vmatprep.subr.mxu0 0.0
    %603 = vmatpush1.msra.mxu0 0.0
    %604 = vmatprep.subr.mxu0 0.0
    %605 = vmatpush1.msra.mxu0 0.0
    %606 = vmatprep.subr.mxu0 0.0
    %607 = vmatpush1.msra.mxu0 0.0
    %608 = vmatprep.mubr.f32.mxu0 0.0
    %v609 = vand.u32 %v44, 4294901760
    %610 = vmatmul.mubr.f32.gmra.mrb[0].mxu0 %v609
    %v611 = vpop.f32.mrb[0].mxu0
    %v612 = vadd.f32 %v493, %v611
    %v613 = vpop.f32.mrb[0].mxu0
    %614 = vdwg.mxu0
    %615 = vmatprep.subr.mxu0 0.0
    %v616 = vand.u32 %v45, 4294901760
    %617 = vmatpush1.msra.mxu0 %v616
    %618 = vmatprep.subr.mxu0 0.0
    %v619 = vand.u32 %v46, 4294901760
    %620 = vmatpush1.msra.mxu0 %v619
    %621 = vmatprep.subr.mxu0 0.0
    %v622 = vand.u32 %v47, 4294901760
    %623 = vmatpush1.msra.mxu0 %v622
    %624 = vmatprep.subr.mxu0 0.0
    %v625 = vand.u32 %v48, 4294901760
    %626 = vmatpush1.msra.mxu0 %v625
    %627 = vmatprep.subr.mxu0 0.0
    %v628 = vand.u32 %v49, 4294901760
    %629 = vmatpush1.msra.mxu0 %v628
    %630 = vmatprep.subr.mxu0 0.0
    %v631 = vand.u32 %v50, 4294901760
    %632 = vmatpush1.msra.mxu0 %v631
    %633 = vmatprep.subr.mxu0 0.0
    %v634 = vand.u32 %v51, 4294901760
    %635 = vmatpush1.msra.mxu0 %v634
    %636 = vmatprep.subr.mxu0 0.0
    %v637 = vand.u32 %v52, 4294901760
    %638 = vmatpush1.msra.mxu0 %v637
    %639 = vmatprep.subr.mxu0 0.0
    %v640 = vand.u32 %v53, 4294901760
    %641 = vmatpush1.msra.mxu0 %v640
    %642 = vmatprep.subr.mxu0 0.0
    %v643 = vand.u32 %v54, 4294901760
    %644 = vmatpush1.msra.mxu0 %v643
    %645 = vmatprep.subr.mxu0 0.0
    %v646 = vand.u32 %v55, 4294901760
    %647 = vmatpush1.msra.mxu0 %v646
    %648 = vmatprep.subr.mxu0 0.0
    %v649 = vand.u32 %v56, 4294901760
    %650 = vmatpush1.msra.mxu0 %v649
    %651 = vmatprep.subr.mxu0 0.0
    %v652 = vand.u32 %v57, 4294901760
    %653 = vmatpush1.msra.mxu0 %v652
    %654 = vmatprep.subr.mxu0 0.0
    %v655 = vand.u32 %v58, 4294901760
    %656 = vmatpush1.msra.mxu0 %v655
    %657 = vmatprep.subr.mxu0 0.0
    %v658 = vand.u32 %v59, 4294901760
    %659 = vmatpush1.msra.mxu0 %v658
    %660 = vmatprep.subr.mxu0 0.0
    %v661 = vand.u32 %v60, 4294901760
    %662 = vmatpush1.msra.mxu0 %v661
    %663 = vmatprep.subr.mxu0 0.0
    %664 = vmatpush1.msra.mxu0 0.0
    %665 = vmatprep.subr.mxu0 0.0
    %666 = vmatpush1.msra.mxu0 0.0
    %667 = vmatprep.subr.mxu0 0.0
    %668 = vmatpush1.msra.mxu0 0.0
    %669 = vmatprep.subr.mxu0 0.0
    %670 = vmatpush1.msra.mxu0 0.0
    %671 = vmatprep.subr.mxu0 0.0
    %672 = vmatpush1.msra.mxu0 0.0
    %673 = vmatprep.subr.mxu0 0.0
    %674 = vmatpush1.msra.mxu0 0.0
    %675 = vmatprep.subr.mxu0 0.0
    %676 = vmatpush1.msra.mxu0 0.0
    %677 = vmatprep.subr.mxu0 0.0
    %678 = vmatpush1.msra.mxu0 0.0
    %679 = vmatprep.subr.mxu0 0.0
    %680 = vmatpush1.msra.mxu0 0.0
    %681 = vmatprep.subr.mxu0 0.0
    %682 = vmatpush1.msra.mxu0 0.0
    %683 = vmatprep.subr.mxu0 0.0
    %684 = vmatpush1.msra.mxu0 0.0
    %685 = vmatprep.subr.mxu0 0.0
    %686 = vmatpush1.msra.mxu0 0.0
    %687 = vmatprep.subr.mxu0 0.0
    %688 = vmatpush1.msra.mxu0 0.0
    %689 = vmatprep.subr.mxu0 0.0
    %690 = vmatpush1.msra.mxu0 0.0
    %691 = vmatprep.subr.mxu0 0.0
    %692 = vmatpush1.msra.mxu0 0.0
    %693 = vmatprep.subr.mxu0 0.0
    %694 = vmatpush1.msra.mxu0 0.0
    %695 = vmatprep.mubr.f32.mxu0 0.0
    %v696 = vand.u32 %v44, 4294901760
    %697 = vmatmul.mubr.f32.gmra.mrb[0].mxu0 %v696
    %v698 = vpop.f32.mrb[0].mxu0
    %v699 = vadd.f32 %v612, %v698
    %v700 = vpop.f32.mrb[0].mxu0
    %701 = vdwg.mxu0
    %v702 = vmul.f32 %v699, 0.03125
    %v703 = vsub.f32 %v44, %v702
    %v704 = vmul.f32 %v703, %v703
    %705 = vmatprep.subr.mxu0 0.0
    %v706 = vand.u32 %v45, 4294901760
    %707 = vmatpush1.msra.mxu0 %v706
    %708 = vmatprep.subr.mxu0 0.0
    %v709 = vand.u32 %v46, 4294901760
    %710 = vmatpush1.msra.mxu0 %v709
    %711 = vmatprep.subr.mxu0 0.0
    %v712 = vand.u32 %v47, 4294901760
    %713 = vmatpush1.msra.mxu0 %v712
    %714 = vmatprep.subr.mxu0 0.0
    %v715 = vand.u32 %v48, 4294901760
    %716 = vmatpush1.msra.mxu0 %v715
    %717 = vmatprep.subr.mxu0 0.0
    %v718 = vand.u32 %v49, 4294901760
    %719 = vmatpush1.msra.mxu0 %v718
    %720 = vmatprep.subr.mxu0 0.0
    %v721 = vand.u32 %v50, 4294901760
    %722 = vmatpush1.msra.mxu0 %v721
    %723 = vmatprep.subr.mxu0 0.0
    %v724 = vand.u32 %v51, 4294901760
    %725 = vmatpush1.msra.mxu0 %v724
    %726 = vmatprep.subr.mxu0 0.0
    %v727 = vand.u32 %v52, 4294901760
    %728 = vmatpush1.msra.mxu0 %v727
    %729 = vmatprep.subr.mxu0 0.0
    %v730 = vand.u32 %v53, 4294901760
    %731 = vmatpush1.msra.mxu0 %v730
    %732 = vmatprep.subr.mxu0 0.0
    %v733 = vand.u32 %v54, 4294901760
    %734 = vmatpush1.msra.mxu0 %v733
    %735 = vmatprep.subr.mxu0 0.0
    %v736 = vand.u32 %v55, 4294901760
    %737 = vmatpush1.msra.mxu0 %v736
    %738 = vmatprep.subr.mxu0 0.0
    %v739 = vand.u32 %v56, 4294901760
    %740 = vmatpush1.msra.mxu0 %v739
    %741 = vmatprep.subr.mxu0 0.0
    %v742 = vand.u32 %v57, 4294901760
    %743 = vmatpush1.msra.mxu0 %v742
    %744 = vmatprep.subr.mxu0 0.0
    %v745 = vand.u32 %v58, 4294901760
    %746 = vmatpush1.msra.mxu0 %v745
    %747 = vmatprep.subr.mxu0 0.0
    %v748 = vand.u32 %v59, 4294901760
    %749 = vmatpush1.msra.mxu0 %v748
    %750 = vmatprep.subr.mxu0 0.0
    %v751 = vand.u32 %v60, 4294901760
    %752 = vmatpush1.msra.mxu0 %v751
    %753 = vmatprep.subr.mxu0 0.0
    %754 = vmatpush1.msra.mxu0 0.0
    %755 = vmatprep.subr.mxu0 0.0
    %756 = vmatpush1.msra.mxu0 0.0
    %757 = vmatprep.subr.mxu0 0.0
    %758 = vmatpush1.msra.mxu0 0.0
    %759 = vmatprep.subr.mxu0 0.0
    %760 = vmatpush1.msra.mxu0 0.0
    %761 = vmatprep.subr.mxu0 0.0
    %762 = vmatpush1.msra.mxu0 0.0
    %763 = vmatprep.subr.mxu0 0.0
    %764 = vmatpush1.msra.mxu0 0.0
    %765 = vmatprep.subr.mxu0 0.0
    %766 = vmatpush1.msra.mxu0 0.0
    %767 = vmatprep.subr.mxu0 0.0
    %768 = vmatpush1.msra.mxu0 0.0
    %769 = vmatprep.subr.mxu0 0.0
    %770 = vmatpush1.msra.mxu0 0.0
    %771 = vmatprep.subr.mxu0 0.0
    %772 = vmatpush1.msra.mxu0 0.0
    %773 = vmatprep.subr.mxu0 0.0
    %774 = vmatpush1.msra.mxu0 0.0
    %775 = vmatprep.subr.mxu0 0.0
    %776 = vmatpush1.msra.mxu0 0.0
    %777 = vmatprep.subr.mxu0 0.0
    %778 = vmatpush1.msra.mxu0 0.0
    %779 = vmatprep.subr.mxu0 0.0
    %780 = vmatpush1.msra.mxu0 0.0
    %781 = vmatprep.subr.mxu0 0.0
    %782 = vmatpush1.msra.mxu0 0.0
    %783 = vmatprep.subr.mxu0 0.0
    %784 = vmatpush1.msra.mxu0 0.0
    %785 = vmatprep.mubr.f32.mxu0 0.0
    %v786 = vand.u32 %v704, 4294901760
    %v787 = vsub.f32 %v704, %v786
    %v788 = vand.u32 %v787, 4294901760
    %v789 = vsub.f32 %v787, %v788
    %v790 = vand.u32 %v789, 4294901760
    %791 = vmatmul.mubr.f32.gmra.mrb[0].mxu0 %v790
    %v792 = vpop.f32.mrb[0].mxu0
    %v793 = vadd.f32 0.0, %v792
    %v794 = vpop.f32.mrb[0].mxu0
    %795 = vdwg.mxu0
    %796 = vmatprep.subr.mxu0 0.0
    %v797 = vand.u32 %v45, 4294901760
    %v798 = vsub.f32 %v45, %v797
    %v799 = vand.u32 %v798, 4294901760
    %v800 = vsub.f32 %v798, %v799
    %v801 = vand.u32 %v800, 4294901760
    %802 = vmatpush1.msra.mxu0 %v801
    %803 = vmatprep.subr.mxu0 0.0
    %v804 = vand.u32 %v46, 4294901760
    %v805 = vsub.f32 %v46, %v804
    %v806 = vand.u32 %v805, 4294901760
    %v807 = vsub.f32 %v805, %v806
    %v808 = vand.u32 %v807, 4294901760
    %809 = vmatpush1.msra.mxu0 %v808
    %810 = vmatprep.subr.mxu0 0.0
    %v811 = vand.u32 %v47, 4294901760
    %v812 = vsub.f32 %v47, %v811
    %v813 = vand.u32 %v812, 4294901760
    %v814 = vsub.f32 %v812, %v813
    %v815 = vand.u32 %v814, 4294901760
    %816 = vmatpush1.msra.mxu0 %v815
    %817 = vmatprep.subr.mxu0 0.0
    %v818 = vand.u32 %v48, 4294901760
    %v819 = vsub.f32 %v48, %v818
    %v820 = vand.u32 %v819, 4294901760
    %v821 = vsub.f32 %v819, %v820
    %v822 = vand.u32 %v821, 4294901760
    %823 = vmatpush1.msra.mxu0 %v822
    %824 = vmatprep.subr.mxu0 0.0
    %v825 = vand.u32 %v49, 4294901760
    %v826 = vsub.f32 %v49, %v825
    %v827 = vand.u32 %v826, 4294901760
    %v828 = vsub.f32 %v826, %v827
    %v829 = vand.u32 %v828, 4294901760
    %830 = vmatpush1.msra.mxu0 %v829
    %831 = vmatprep.subr.mxu0 0.0
    %v832 = vand.u32 %v50, 4294901760
    %v833 = vsub.f32 %v50, %v832
    %v834 = vand.u32 %v833, 4294901760
    %v835 = vsub.f32 %v833, %v834
    %v836 = vand.u32 %v835, 4294901760
    %837 = vmatpush1.msra.mxu0 %v836
    %838 = vmatprep.subr.mxu0 0.0
    %v839 = vand.u32 %v51, 4294901760
    %v840 = vsub.f32 %v51, %v839
    %v841 = vand.u32 %v840, 4294901760
    %v842 = vsub.f32 %v840, %v841
    %v843 = vand.u32 %v842, 4294901760
    %844 = vmatpush1.msra.mxu0 %v843
    %845 = vmatprep.subr.mxu0 0.0
    %v846 = vand.u32 %v52, 4294901760
    %v847 = vsub.f32 %v52, %v846
    %v848 = vand.u32 %v847, 4294901760
    %v849 = vsub.f32 %v847, %v848
    %v850 = vand.u32 %v849, 4294901760
    %851 = vmatpush1.msra.mxu0 %v850
    %852 = vmatprep.subr.mxu0 0.0
    %v853 = vand.u32 %v53, 4294901760
    %v854 = vsub.f32 %v53, %v853
    %v855 = vand.u32 %v854, 4294901760
    %v856 = vsub.f32 %v854, %v855
    %v857 = vand.u32 %v856, 4294901760
    %858 = vmatpush1.msra.mxu0 %v857
    %859 = vmatprep.subr.mxu0 0.0
    %v860 = vand.u32 %v54, 4294901760
    %v861 = vsub.f32 %v54, %v860
    %v862 = vand.u32 %v861, 4294901760
    %v863 = vsub.f32 %v861, %v862
    %v864 = vand.u32 %v863, 4294901760
    %865 = vmatpush1.msra.mxu0 %v864
    %866 = vmatprep.subr.mxu0 0.0
    %v867 = vand.u32 %v55, 4294901760
    %v868 = vsub.f32 %v55, %v867
    %v869 = vand.u32 %v868, 4294901760
    %v870 = vsub.f32 %v868, %v869
    %v871 = vand.u32 %v870, 4294901760
    %872 = vmatpush1.msra.mxu0 %v871
    %873 = vmatprep.subr.mxu0 0.0
    %v874 = vand.u32 %v56, 4294901760
    %v875 = vsub.f32 %v56, %v874
    %v876 = vand.u32 %v875, 4294901760
    %v877 = vsub.f32 %v875, %v876
    %v878 = vand.u32 %v877, 4294901760
    %879 = vmatpush1.msra.mxu0 %v878
    %880 = vmatprep.subr.mxu0 0.0
    %v881 = vand.u32 %v57, 4294901760
    %v882 = vsub.f32 %v57, %v881
    %v883 = vand.u32 %v882, 4294901760
    %v884 = vsub.f32 %v882, %v883
    %v885 = vand.u32 %v884, 4294901760
    %886 = vmatpush1.msra.mxu0 %v885
    %887 = vmatprep.subr.mxu0 0.0
    %v888 = vand.u32 %v58, 4294901760
    %v889 = vsub.f32 %v58, %v888
    %v890 = vand.u32 %v889, 4294901760
    %v891 = vsub.f32 %v889, %v890
    %v892 = vand.u32 %v891, 4294901760
    %893 = vmatpush1.msra.mxu0 %v892
    %894 = vmatprep.subr.mxu0 0.0
    %v895 = vand.u32 %v59, 4294901760
    %v896 = vsub.f32 %v59, %v895
    %v897 = vand.u32 %v896, 4294901760
    %v898 = vsub.f32 %v896, %v897
    %v899 = vand.u32 %v898, 4294901760
    %900 = vmatpush1.msra.mxu0 %v899
    %901 = vmatprep.subr.mxu0 0.0
    %v902 = vand.u32 %v60, 4294901760
    %v903 = vsub.f32 %v60, %v902
    %v904 = vand.u32 %v903, 4294901760
    %v905 = vsub.f32 %v903, %v904
    %v906 = vand.u32 %v905, 4294901760
    %907 = vmatpush1.msra.mxu0 %v906
    %908 = vmatprep.subr.mxu0 0.0
    %909 = vmatpush1.msra.mxu0 0.0
    %910 = vmatprep.subr.mxu0 0.0
    %911 = vmatpush1.msra.mxu0 0.0
    %912 = vmatprep.subr.mxu0 0.0
    %913 = vmatpush1.msra.mxu0 0.0
    %914 = vmatprep.subr.mxu0 0.0
    %915 = vmatpush1.msra.mxu0 0.0
    %916 = vmatprep.subr.mxu0 0.0
    %917 = vmatpush1.msra.mxu0 0.0
    %918 = vmatprep.subr.mxu0 0.0
    %919 = vmatpush1.msra.mxu0 0.0
    %920 = vmatprep.subr.mxu0 0.0
    %921 = vmatpush1.msra.mxu0 0.0
    %922 = vmatprep.subr.mxu0 0.0
    %923 = vmatpush1.msra.mxu0 0.0
    %924 = vmatprep.subr.mxu0 0.0
    %925 = vmatpush1.msra.mxu0 0.0
    %926 = vmatprep.subr.mxu0 0.0
    %927 = vmatpush1.msra.mxu0 0.0
    %928 = vmatprep.subr.mxu0 0.0
    %929 = vmatpush1.msra.mxu0 0.0
    %930 = vmatprep.subr.mxu0 0.0
    %931 = vmatpush1.msra.mxu0 0.0
    %932 = vmatprep.subr.mxu0 0.0
    %933 = vmatpush1.msra.mxu0 0.0
    %934 = vmatprep.subr.mxu0 0.0
    %935 = vmatpush1.msra.mxu0 0.0
    %936 = vmatprep.subr.mxu0 0.0
    %937 = vmatpush1.msra.mxu0 0.0
    %938 = vmatprep.subr.mxu0 0.0
    %939 = vmatpush1.msra.mxu0 0.0
    %940 = vmatprep.mubr.f32.mxu0 0.0
    %v941 = vand.u32 %v704, 4294901760
    %942 = vmatmul.mubr.f32.gmra.mrb[0].mxu0 %v941
    %v943 = vpop.f32.mrb[0].mxu0
    %v944 = vadd.f32 %v793, %v943
    %v945 = vpop.f32.mrb[0].mxu0
    %946 = vdwg.mxu0
    %947 = vmatprep.subr.mxu0 0.0
    %v948 = vand.u32 %v45, 4294901760
    %v949 = vsub.f32 %v45, %v948
    %950 = vmatpush1.msra.mxu0 %v949
    %951 = vmatprep.subr.mxu0 0.0
    %v952 = vand.u32 %v46, 4294901760
    %v953 = vsub.f32 %v46, %v952
    %954 = vmatpush1.msra.mxu0 %v953
    %955 = vmatprep.subr.mxu0 0.0
    %v956 = vand.u32 %v47, 4294901760
    %v957 = vsub.f32 %v47, %v956
    %958 = vmatpush1.msra.mxu0 %v957
    %959 = vmatprep.subr.mxu0 0.0
    %v960 = vand.u32 %v48, 4294901760
    %v961 = vsub.f32 %v48, %v960
    %962 = vmatpush1.msra.mxu0 %v961
    %963 = vmatprep.subr.mxu0 0.0
    %v964 = vand.u32 %v49, 4294901760
    %v965 = vsub.f32 %v49, %v964
    %966 = vmatpush1.msra.mxu0 %v965
    %967 = vmatprep.subr.mxu0 0.0
    %v968 = vand.u32 %v50, 4294901760
    %v969 = vsub.f32 %v50, %v968
    %970 = vmatpush1.msra.mxu0 %v969
    %971 = vmatprep.subr.mxu0 0.0
    %v972 = vand.u32 %v51, 4294901760
    %v973 = vsub.f32 %v51, %v972
    %974 = vmatpush1.msra.mxu0 %v973
    %975 = vmatprep.subr.mxu0 0.0
    %v976 = vand.u32 %v52, 4294901760
    %v977 = vsub.f32 %v52, %v976
    %978 = vmatpush1.msra.mxu0 %v977
    %979 = vmatprep.subr.mxu0 0.0
    %v980 = vand.u32 %v53, 4294901760
    %v981 = vsub.f32 %v53, %v980
    %982 = vmatpush1.msra.mxu0 %v981
    %983 = vmatprep.subr.mxu0 0.0
    %v984 = vand.u32 %v54, 4294901760
    %v985 = vsub.f32 %v54, %v984
    %986 = vmatpush1.msra.mxu0 %v985
    %987 = vmatprep.subr.mxu0 0.0
    %v988 = vand.u32 %v55, 4294901760
    %v989 = vsub.f32 %v55, %v988
    %990 = vmatpush1.msra.mxu0 %v989
    %991 = vmatprep.subr.mxu0 0.0
    %v992 = vand.u32 %v56, 4294901760
    %v993 = vsub.f32 %v56, %v992
    %994 = vmatpush1.msra.mxu0 %v993
    %995 = vmatprep.subr.mxu0 0.0
    %v996 = vand.u32 %v57, 4294901760
    %v997 = vsub.f32 %v57, %v996
    %998 = vmatpush1.msra.mxu0 %v997
    %999 = vmatprep.subr.mxu0 0.0
    %v1000 = vand.u32 %v58, 4294901760
    %v1001 = vsub.f32 %v58, %v1000
    %1002 = vmatpush1.msra.mxu0 %v1001
    %1003 = vmatprep.subr.mxu0 0.0
    %v1004 = vand.u32 %v59, 4294901760
    %v1005 = vsub.f32 %v59, %v1004
    %1006 = vmatpush1.msra.mxu0 %v1005
    %1007 = vmatprep.subr.mxu0 0.0
    %v1008 = vand.u32 %v60, 4294901760
    %v1009 = vsub.f32 %v60, %v1008
    %1010 = vmatpush1.msra.mxu0 %v1009
    %1011 = vmatprep.subr.mxu0 0.0
    %1012 = vmatpush1.msra.mxu0 0.0
    %1013 = vmatprep.subr.mxu0 0.0
    %1014 = vmatpush1.msra.mxu0 0.0
    %1015 = vmatprep.subr.mxu0 0.0
    %1016 = vmatpush1.msra.mxu0 0.0
    %1017 = vmatprep.subr.mxu0 0.0
    %1018 = vmatpush1.msra.mxu0 0.0
    %1019 = vmatprep.subr.mxu0 0.0
    %1020 = vmatpush1.msra.mxu0 0.0
    %1021 = vmatprep.subr.mxu0 0.0
    %1022 = vmatpush1.msra.mxu0 0.0
    %1023 = vmatprep.subr.mxu0 0.0
    %1024 = vmatpush1.msra.mxu0 0.0
    %1025 = vmatprep.subr.mxu0 0.0
    %1026 = vmatpush1.msra.mxu0 0.0
    %1027 = vmatprep.subr.mxu0 0.0
    %1028 = vmatpush1.msra.mxu0 0.0
    %1029 = vmatprep.subr.mxu0 0.0
    %1030 = vmatpush1.msra.mxu0 0.0
    %1031 = vmatprep.subr.mxu0 0.0
    %1032 = vmatpush1.msra.mxu0 0.0
    %1033 = vmatprep.subr.mxu0 0.0
    %1034 = vmatpush1.msra.mxu0 0.0
    %1035 = vmatprep.subr.mxu0 0.0
    %1036 = vmatpush1.msra.mxu0 0.0
    %1037 = vmatprep.subr.mxu0 0.0
    %1038 = vmatpush1.msra.mxu0 0.0
    %1039 = vmatprep.subr.mxu0 0.0
    %1040 = vmatpush1.msra.mxu0 0.0
    %1041 = vmatprep.subr.mxu0 0.0
    %1042 = vmatpush1.msra.mxu0 0.0
    %1043 = vmatprep.mubr.f32.mxu0 0.0
    %v1044 = vand.u32 %v704, 4294901760
    %v1045 = vsub.f32 %v704, %v1044
    %1046 = vmatmul.mubr.f32.gmra.mrb[0].mxu0 %v1045
    %v1047 = vpop.f32.mrb[0].mxu0
    %v1048 = vadd.f32 %v944, %v1047
    %v1049 = vpop.f32.mrb[0].mxu0
    %1050 = vdwg.mxu0
    %1051 = vmatprep.subr.mxu0 0.0
    %v1052 = vand.u32 %v45, 4294901760
    %1053 = vmatpush1.msra.mxu0 %v1052
    %1054 = vmatprep.subr.mxu0 0.0
    %v1055 = vand.u32 %v46, 4294901760
    %1056 = vmatpush1.msra.mxu0 %v1055
    %1057 = vmatprep.subr.mxu0 0.0
    %v1058 = vand.u32 %v47, 4294901760
    %1059 = vmatpush1.msra.mxu0 %v1058
    %1060 = vmatprep.subr.mxu0 0.0
    %v1061 = vand.u32 %v48, 4294901760
    %1062 = vmatpush1.msra.mxu0 %v1061
    %1063 = vmatprep.subr.mxu0 0.0
    %v1064 = vand.u32 %v49, 4294901760
    %1065 = vmatpush1.msra.mxu0 %v1064
    %1066 = vmatprep.subr.mxu0 0.0
    %v1067 = vand.u32 %v50, 4294901760
    %1068 = vmatpush1.msra.mxu0 %v1067
    %1069 = vmatprep.subr.mxu0 0.0
    %v1070 = vand.u32 %v51, 4294901760
    %1071 = vmatpush1.msra.mxu0 %v1070
    %1072 = vmatprep.subr.mxu0 0.0
    %v1073 = vand.u32 %v52, 4294901760
    %1074 = vmatpush1.msra.mxu0 %v1073
    %1075 = vmatprep.subr.mxu0 0.0
    %v1076 = vand.u32 %v53, 4294901760
    %1077 = vmatpush1.msra.mxu0 %v1076
    %1078 = vmatprep.subr.mxu0 0.0
    %v1079 = vand.u32 %v54, 4294901760
    %1080 = vmatpush1.msra.mxu0 %v1079
    %1081 = vmatprep.subr.mxu0 0.0
    %v1082 = vand.u32 %v55, 4294901760
    %1083 = vmatpush1.msra.mxu0 %v1082
    %1084 = vmatprep.subr.mxu0 0.0
    %v1085 = vand.u32 %v56, 4294901760
    %1086 = vmatpush1.msra.mxu0 %v1085
    %1087 = vmatprep.subr.mxu0 0.0
    %v1088 = vand.u32 %v57, 4294901760
    %1089 = vmatpush1.msra.mxu0 %v1088
    %1090 = vmatprep.subr.mxu0 0.0
    %v1091 = vand.u32 %v58, 4294901760
    %1092 = vmatpush1.msra.mxu0 %v1091
    %1093 = vmatprep.subr.mxu0 0.0
    %v1094 = vand.u32 %v59, 4294901760
    %1095 = vmatpush1.msra.mxu0 %v1094
    %1096 = vmatprep.subr.mxu0 0.0
    %v1097 = vand.u32 %v60, 4294901760
    %1098 = vmatpush1.msra.mxu0 %v1097
    %1099 = vmatprep.subr.mxu0 0.0
    %1100 = vmatpush1.msra.mxu0 0.0
    %1101 = vmatprep.subr.mxu0 0.0
    %1102 = vmatpush1.msra.mxu0 0.0
    %1103 = vmatprep.subr.mxu0 0.0
    %1104 = vmatpush1.msra.mxu0 0.0
    %1105 = vmatprep.subr.mxu0 0.0
    %1106 = vmatpush1.msra.mxu0 0.0
    %1107 = vmatprep.subr.mxu0 0.0
    %1108 = vmatpush1.msra.mxu0 0.0
    %1109 = vmatprep.subr.mxu0 0.0
    %1110 = vmatpush1.msra.mxu0 0.0
    %1111 = vmatprep.subr.mxu0 0.0
    %1112 = vmatpush1.msra.mxu0 0.0
    %1113 = vmatprep.subr.mxu0 0.0
    %1114 = vmatpush1.msra.mxu0 0.0
    %1115 = vmatprep.subr.mxu0 0.0
    %1116 = vmatpush1.msra.mxu0 0.0
    %1117 = vmatprep.subr.mxu0 0.0
    %1118 = vmatpush1.msra.mxu0 0.0
    %1119 = vmatprep.subr.mxu0 0.0
    %1120 = vmatpush1.msra.mxu0 0.0
    %1121 = vmatprep.subr.mxu0 0.0
    %1122 = vmatpush1.msra.mxu0 0.0
    %1123 = vmatprep.subr.mxu0 0.0
    %1124 = vmatpush1.msra.mxu0 0.0
    %1125 = vmatprep.subr.mxu0 0.0
    %1126 = vmatpush1.msra.mxu0 0.0
    %1127 = vmatprep.subr.mxu0 0.0
    %1128 = vmatpush1.msra.mxu0 0.0
    %1129 = vmatprep.subr.mxu0 0.0
    %1130 = vmatpush1.msra.mxu0 0.0
    %1131 = vmatprep.mubr.f32.mxu0 0.0
    %v1132 = vand.u32 %v704, 4294901760
    %v1133 = vsub.f32 %v704, %v1132
    %v1134 = vand.u32 %v1133, 4294901760
    %1135 = vmatmul.mubr.f32.gmra.mrb[0].mxu0 %v1134
    %v1136 = vpop.f32.mrb[0].mxu0
    %v1137 = vadd.f32 %v1048, %v1136
    %v1138 = vpop.f32.mrb[0].mxu0
    %1139 = vdwg.mxu0
    %1140 = vmatprep.subr.mxu0 0.0
    %v1141 = vand.u32 %v45, 4294901760
    %v1142 = vsub.f32 %v45, %v1141
    %v1143 = vand.u32 %v1142, 4294901760
    %1144 = vmatpush1.msra.mxu0 %v1143
    %1145 = vmatprep.subr.mxu0 0.0
    %v1146 = vand.u32 %v46, 4294901760
    %v1147 = vsub.f32 %v46, %v1146
    %v1148 = vand.u32 %v1147, 4294901760
    %1149 = vmatpush1.msra.mxu0 %v1148
    %1150 = vmatprep.subr.mxu0 0.0
    %v1151 = vand.u32 %v47, 4294901760
    %v1152 = vsub.f32 %v47, %v1151
    %v1153 = vand.u32 %v1152, 4294901760
    %1154 = vmatpush1.msra.mxu0 %v1153
    %1155 = vmatprep.subr.mxu0 0.0
    %v1156 = vand.u32 %v48, 4294901760
    %v1157 = vsub.f32 %v48, %v1156
    %v1158 = vand.u32 %v1157, 4294901760
    %1159 = vmatpush1.msra.mxu0 %v1158
    %1160 = vmatprep.subr.mxu0 0.0
    %v1161 = vand.u32 %v49, 4294901760
    %v1162 = vsub.f32 %v49, %v1161
    %v1163 = vand.u32 %v1162, 4294901760
    %1164 = vmatpush1.msra.mxu0 %v1163
    %1165 = vmatprep.subr.mxu0 0.0
    %v1166 = vand.u32 %v50, 4294901760
    %v1167 = vsub.f32 %v50, %v1166
    %v1168 = vand.u32 %v1167, 4294901760
    %1169 = vmatpush1.msra.mxu0 %v1168
    %1170 = vmatprep.subr.mxu0 0.0
    %v1171 = vand.u32 %v51, 4294901760
    %v1172 = vsub.f32 %v51, %v1171
    %v1173 = vand.u32 %v1172, 4294901760
    %1174 = vmatpush1.msra.mxu0 %v1173
    %1175 = vmatprep.subr.mxu0 0.0
    %v1176 = vand.u32 %v52, 4294901760
    %v1177 = vsub.f32 %v52, %v1176
    %v1178 = vand.u32 %v1177, 4294901760
    %1179 = vmatpush1.msra.mxu0 %v1178
    %1180 = vmatprep.subr.mxu0 0.0
    %v1181 = vand.u32 %v53, 4294901760
    %v1182 = vsub.f32 %v53, %v1181
    %v1183 = vand.u32 %v1182, 4294901760
    %1184 = vmatpush1.msra.mxu0 %v1183
    %1185 = vmatprep.subr.mxu0 0.0
    %v1186 = vand.u32 %v54, 4294901760
    %v1187 = vsub.f32 %v54, %v1186
    %v1188 = vand.u32 %v1187, 4294901760
    %1189 = vmatpush1.msra.mxu0 %v1188
    %1190 = vmatprep.subr.mxu0 0.0
    %v1191 = vand.u32 %v55, 4294901760
    %v1192 = vsub.f32 %v55, %v1191
    %v1193 = vand.u32 %v1192, 4294901760
    %1194 = vmatpush1.msra.mxu0 %v1193
    %1195 = vmatprep.subr.mxu0 0.0
    %v1196 = vand.u32 %v56, 4294901760
    %v1197 = vsub.f32 %v56, %v1196
    %v1198 = vand.u32 %v1197, 4294901760
    %1199 = vmatpush1.msra.mxu0 %v1198
    %1200 = vmatprep.subr.mxu0 0.0
    %v1201 = vand.u32 %v57, 4294901760
    %v1202 = vsub.f32 %v57, %v1201
    %v1203 = vand.u32 %v1202, 4294901760
    %1204 = vmatpush1.msra.mxu0 %v1203
    %1205 = vmatprep.subr.mxu0 0.0
    %v1206 = vand.u32 %v58, 4294901760
    %v1207 = vsub.f32 %v58, %v1206
    %v1208 = vand.u32 %v1207, 4294901760
    %1209 = vmatpush1.msra.mxu0 %v1208
    %1210 = vmatprep.subr.mxu0 0.0
    %v1211 = vand.u32 %v59, 4294901760
    %v1212 = vsub.f32 %v59, %v1211
    %v1213 = vand.u32 %v1212, 4294901760
    %1214 = vmatpush1.msra.mxu0 %v1213
    %1215 = vmatprep.subr.mxu0 0.0
    %v1216 = vand.u32 %v60, 4294901760
    %v1217 = vsub.f32 %v60, %v1216
    %v1218 = vand.u32 %v1217, 4294901760
    %1219 = vmatpush1.msra.mxu0 %v1218
    %1220 = vmatprep.subr.mxu0 0.0
    %1221 = vmatpush1.msra.mxu0 0.0
    %1222 = vmatprep.subr.mxu0 0.0
    %1223 = vmatpush1.msra.mxu0 0.0
    %1224 = vmatprep.subr.mxu0 0.0
    %1225 = vmatpush1.msra.mxu0 0.0
    %1226 = vmatprep.subr.mxu0 0.0
    %1227 = vmatpush1.msra.mxu0 0.0
    %1228 = vmatprep.subr.mxu0 0.0
    %1229 = vmatpush1.msra.mxu0 0.0
    %1230 = vmatprep.subr.mxu0 0.0
    %1231 = vmatpush1.msra.mxu0 0.0
    %1232 = vmatprep.subr.mxu0 0.0
    %1233 = vmatpush1.msra.mxu0 0.0
    %1234 = vmatprep.subr.mxu0 0.0
    %1235 = vmatpush1.msra.mxu0 0.0
    %1236 = vmatprep.subr.mxu0 0.0
    %1237 = vmatpush1.msra.mxu0 0.0
    %1238 = vmatprep.subr.mxu0 0.0
    %1239 = vmatpush1.msra.mxu0 0.0
    %1240 = vmatprep.subr.mxu0 0.0
    %1241 = vmatpush1.msra.mxu0 0.0
    %1242 = vmatprep.subr.mxu0 0.0
    %1243 = vmatpush1.msra.mxu0 0.0
    %1244 = vmatprep.subr.mxu0 0.0
    %1245 = vmatpush1.msra.mxu0 0.0
    %1246 = vmatprep.subr.mxu0 0.0
    %1247 = vmatpush1.msra.mxu0 0.0
    %1248 = vmatprep.subr.mxu0 0.0
    %1249 = vmatpush1.msra.mxu0 0.0
    %1250 = vmatprep.subr.mxu0 0.0
    %1251 = vmatpush1.msra.mxu0 0.0
    %1252 = vmatprep.mubr.f32.mxu0 0.0
    %v1253 = vand.u32 %v704, 4294901760
    %1254 = vmatmul.mubr.f32.gmra.mrb[0].mxu0 %v1253
    %v1255 = vpop.f32.mrb[0].mxu0
    %v1256 = vadd.f32 %v1137, %v1255
    %v1257 = vpop.f32.mrb[0].mxu0
    %1258 = vdwg.mxu0
    %1259 = vmatprep.subr.mxu0 0.0
    %v1260 = vand.u32 %v45, 4294901760
    %1261 = vmatpush1.msra.mxu0 %v1260
    %1262 = vmatprep.subr.mxu0 0.0
    %v1263 = vand.u32 %v46, 4294901760
    %1264 = vmatpush1.msra.mxu0 %v1263
    %1265 = vmatprep.subr.mxu0 0.0
    %v1266 = vand.u32 %v47, 4294901760
    %1267 = vmatpush1.msra.mxu0 %v1266
    %1268 = vmatprep.subr.mxu0 0.0
    %v1269 = vand.u32 %v48, 4294901760
    %1270 = vmatpush1.msra.mxu0 %v1269
    %1271 = vmatprep.subr.mxu0 0.0
    %v1272 = vand.u32 %v49, 4294901760
    %1273 = vmatpush1.msra.mxu0 %v1272
    %1274 = vmatprep.subr.mxu0 0.0
    %v1275 = vand.u32 %v50, 4294901760
    %1276 = vmatpush1.msra.mxu0 %v1275
    %1277 = vmatprep.subr.mxu0 0.0
    %v1278 = vand.u32 %v51, 4294901760
    %1279 = vmatpush1.msra.mxu0 %v1278
    %1280 = vmatprep.subr.mxu0 0.0
    %v1281 = vand.u32 %v52, 4294901760
    %1282 = vmatpush1.msra.mxu0 %v1281
    %1283 = vmatprep.subr.mxu0 0.0
    %v1284 = vand.u32 %v53, 4294901760
    %1285 = vmatpush1.msra.mxu0 %v1284
    %1286 = vmatprep.subr.mxu0 0.0
    %v1287 = vand.u32 %v54, 4294901760
    %1288 = vmatpush1.msra.mxu0 %v1287
    %1289 = vmatprep.subr.mxu0 0.0
    %v1290 = vand.u32 %v55, 4294901760
    %1291 = vmatpush1.msra.mxu0 %v1290
    %1292 = vmatprep.subr.mxu0 0.0
    %v1293 = vand.u32 %v56, 4294901760
    %1294 = vmatpush1.msra.mxu0 %v1293
    %1295 = vmatprep.subr.mxu0 0.0
    %v1296 = vand.u32 %v57, 4294901760
    %1297 = vmatpush1.msra.mxu0 %v1296
    %1298 = vmatprep.subr.mxu0 0.0
    %v1299 = vand.u32 %v58, 4294901760
    %1300 = vmatpush1.msra.mxu0 %v1299
    %1301 = vmatprep.subr.mxu0 0.0
    %v1302 = vand.u32 %v59, 4294901760
    %1303 = vmatpush1.msra.mxu0 %v1302
    %1304 = vmatprep.subr.mxu0 0.0
    %v1305 = vand.u32 %v60, 4294901760
    %1306 = vmatpush1.msra.mxu0 %v1305
    %1307 = vmatprep.subr.mxu0 0.0
    %1308 = vmatpush1.msra.mxu0 0.0
    %1309 = vmatprep.subr.mxu0 0.0
    %1310 = vmatpush1.msra.mxu0 0.0
    %1311 = vmatprep.subr.mxu0 0.0
    %1312 = vmatpush1.msra.mxu0 0.0
    %1313 = vmatprep.subr.mxu0 0.0
    %1314 = vmatpush1.msra.mxu0 0.0
    %1315 = vmatprep.subr.mxu0 0.0
    %1316 = vmatpush1.msra.mxu0 0.0
    %1317 = vmatprep.subr.mxu0 0.0
    %1318 = vmatpush1.msra.mxu0 0.0
    %1319 = vmatprep.subr.mxu0 0.0
    %1320 = vmatpush1.msra.mxu0 0.0
    %1321 = vmatprep.subr.mxu0 0.0
    %1322 = vmatpush1.msra.mxu0 0.0
    %1323 = vmatprep.subr.mxu0 0.0
    %1324 = vmatpush1.msra.mxu0 0.0
    %1325 = vmatprep.subr.mxu0 0.0
    %1326 = vmatpush1.msra.mxu0 0.0
    %1327 = vmatprep.subr.mxu0 0.0
    %1328 = vmatpush1.msra.mxu0 0.0
    %1329 = vmatprep.subr.mxu0 0.0
    %1330 = vmatpush1.msra.mxu0 0.0
    %1331 = vmatprep.subr.mxu0 0.0
    %1332 = vmatpush1.msra.mxu0 0.0
    %1333 = vmatprep.subr.mxu0 0.0
    %1334 = vmatpush1.msra.mxu0 0.0
    %1335 = vmatprep.subr.mxu0 0.0
    %1336 = vmatpush1.msra.mxu0 0.0
    %1337 = vmatprep.subr.mxu0 0.0
    %1338 = vmatpush1.msra.mxu0 0.0
    %1339 = vmatprep.mubr.f32.mxu0 0.0
    %v1340 = vand.u32 %v704, 4294901760
    %1341 = vmatmul.mubr.f32.gmra.mrb[0].mxu0 %v1340
    %v1342 = vpop.f32.mrb[0].mxu0
    %v1343 = vadd.f32 %v1256, %v1342
    %v1344 = vpop.f32.mrb[0].mxu0
    %1345 = vdwg.mxu0
    %v1346 = vmul.f32 %v1343, 0.032258064
    %v1347 = vrsqrt.pop %v1346
    %v1348 = vmul.f32 %v1346, %v1347
    %vm1349 = vcmp.eq.f32.partialorder %v1346, inf
    %v1350 = vsel %vm1349, %v1346, %v1348
    %vm1351 = vcmp.eq.f32.partialorder %v1346, 0.0
    %v1352 = vand.u32 %v1346, 2147483648
    %v1353 = vsel %vm1351, %v1352, %v1350
    %v1354 = vadd.f32 %v1353, 1e-06
    %v1355 = vrcp.pop %v1354
    %v1356 = vmul.f32 1.0, %v1355
    %v1357 = vmul.f32 %v703, %v1356
    %v1358 = vld [vmem:[%s1] sm:$0x1]
    %v1360 = vlaneseq
    %v1361 = vshrl.u32 %v1360, 7
    %v1362 = vsub.s32 0, %v1361
    %v1363 = vrot.slane %v1358, %v1362
    %v1365 = vmul.f32 %v1357, %v1363
    %v1366 = vld [vmem:[%s2] sm:$0x1]
    %v1368 = vlaneseq
    %v1369 = vshrl.u32 %v1368, 7
    %v1370 = vsub.s32 0, %v1369
    %v1371 = vrot.slane %v1366, %v1370
    %v1373 = vadd.f32 %v1365, %v1371
    %1374 = vst [vmem:[#allocation7] sm:$0xf] %v1373
    // Predicated region
    $region26: #{tpu_custom_call.1} parent=1 // pred_check
      _
    $region27: #{tpu_custom_call.1} parent=1 // pred_check_branch
      %1376 = sbr.rel (0) target = $region29
    $region28: #{tpu_custom_call.1} parent=1 // pred_region
      %s1378 = ssub.s32 64, 64
      %1379 = vsyncadd [#allocation4], %s1378
      %s1381 = sshll.u32 [#allocation7], 4
      %s1382 = int_to_ptr.vmem [resolvable:$true] %s1381
      %1384 = dma.vmem_to_hbm [thread:$0]  %s1382, 64, %s4, [#allocation4]
    $region29: #{tpu_custom_call.1} parent=1 // pred_fallthru
      _
    // Predicated region
    $region30: #{tpu_custom_call.1} parent=1 // pred_check
      _
    $region31: #{tpu_custom_call.1} parent=1 // pred_check_branch
      %1386 = sbr.rel (0) target = $region33
    $region32: #{tpu_custom_call.1} parent=1 // pred_region
      %1387 = dma.done [#allocation4], 64
    $region33: #{tpu_custom_call.1} parent=1 // pred_fallthru
      _
    %1388 = vsyncpa [#allocation3], 1
    %1389 = vsyncpa [#allocation6], 1
    %1390 = vsyncpa [#allocation4], 1

</llo_original>
